<compile_context>
chip_gen: v5e
topology: v5e:2x2
jax: 0.10.0
libtpu: 0.0.40
codegen_flags: <defaults>
</compile_context>

<pallas_src>
import functools

import jax
import jax.numpy as jnp
from jax import lax
from jax.experimental import pallas as pl
from jax.experimental.pallas import tpu as pltpu

LANE = 128
SUBLANE = 8


def _round_up(x: int, m: int) -> int:
    return ((x + m - 1) // m) * m


def _gtconv_kernel(filt_ref, a_ref, o_ref, *, n_paths, n_rels, chunk):
    """filt_ref: (P, R) f32 in SMEM; a_ref: (R, ts, 128) f32; o_ref: (P, ts, 128) f32."""
    ts = a_ref.shape[1]
    n_chunks = ts // chunk

    def compute_chunk(off):
        # One fused accumulation chain per output plane over a (chunk, 128)
        # window: intermediates stay in vregs, a single store per output
        # element, VPU broadcast-FMA with SMEM scalars (P, R are tiny).
        for p in range(n_paths):
            acc = filt_ref[p, 0] * a_ref[0, pl.ds(off, chunk), :]
            for r in range(1, n_rels):
                acc = acc + filt_ref[p, r] * a_ref[r, pl.ds(off, chunk), :]
            o_ref[p, pl.ds(off, chunk), :] = acc.astype(o_ref.dtype)

    if n_chunks == 1:
        compute_chunk(0)
    else:
        def body(c, carry):
            compute_chunk(pl.multiple_of(c * chunk, chunk))
            return carry

        lax.fori_loop(0, n_chunks, body, 0, unroll=n_chunks <= 8)


def gtconv(weight, adj, softmax_flag=True, vmem_budget_bytes=12 * 1024 * 1024):
    """weight: (P, R) f32; adj: (R, N, N) f32 -> (P, N, N) f32."""
    P, R = weight.shape
    R_a, N, N_a = adj.shape
    assert R_a == R and N_a == N

    # Tiny (P, R) filter: compute once in the wrapper, pass via SMEM.
    w32 = weight.astype(jnp.float32)
    filt = jax.nn.softmax(w32, axis=1) if softmax_flag else w32

    NN = N * N
    NT = pl.cdiv(NN, LANE)
    NT_pad = _round_up(NT, SUBLANE)          # align to (8,128) tiles only
    pad = NT_pad * LANE - NN

    a_flat = adj.astype(jnp.float32).reshape(R, NN)
    if pad:
        a_flat = jnp.pad(a_flat, ((0, 0), (0, pad)))   # only when N*N not 1024-aligned
    a3 = a_flat.reshape(R, NT_pad, LANE)               # free reshape when pad == 0

    # ---- adaptive tile selection -------------------------------------------
    per_sublane_bytes = 2 * (P + R) * LANE * 4          # double-buffered, f32
    ts = (vmem_budget_bytes // per_sublane_bytes) // SUBLANE * SUBLANE
    ts = max(SUBLANE, min(ts, 1024, NT_pad))
    if NT_pad > SUBLANE:
        # keep >= 2 grid steps so the "parallel" axis can feed both v7x TCs
        ts = max(SUBLANE, min(ts, _round_up(pl.cdiv(NT_pad, 2), SUBLANE)))
    if ts >= 128:
        ts = (ts // 64) * 64                 # large in-kernel chunks (64/128)
    n_steps = pl.cdiv(NT_pad, ts)            # last block may be partial
    chunk = next(c for c in (128, 64, 32, 16, 8) if ts % c == 0)

    footprint = 2 * (P + R) * ts * LANE * 4
    vmem_limit = int(max(footprint + (4 << 20), 16 << 20))

    kernel = functools.partial(_gtconv_kernel, n_paths=P, n_rels=R, chunk=chunk)

    out3 = pl.pallas_call(
        kernel,
        out_shape=jax.ShapeDtypeStruct((P, NT_pad, LANE), jnp.float32),
        grid_spec=pltpu.PrefetchScalarGridSpec(
            num_scalar_prefetch=0,
            grid=(n_steps,),
            in_specs=[
                pl.BlockSpec(memory_space=pltpu.MemorySpace.SMEM),   # (P, R) filter
                pl.BlockSpec((R, ts, LANE), lambda j: (0, j, 0)),    # adjacency slab
            ],
            out_specs=pl.BlockSpec((P, ts, LANE), lambda j: (0, j, 0)),
        ),
        compiler_params=pltpu.CompilerParams(
            dimension_semantics=("parallel",),
            vmem_limit_bytes=vmem_limit,
        ),
    )(filt, a3)

    if pad:
        out_flat = out3.reshape(P, NT_pad * LANE)[:, :NN]
    else:
        out_flat = out3.reshape(P, NN)                   # free, no extra HBM pass
    return out_flat.reshape(P, N, N)


if __name__ == "__main__":
    key = jax.random.PRNGKey(0)
    k_w1, k_a1, k_w2, k_a2, k_w3, k_a3 = jax.random.split(key, 6)

    # 1) Tiny case with a padded tail (N*N not 1024-aligned), single grid step.
    P1, R1, N1 = 4, 4, 16
    w1 = 0.01 * jax.random.normal(k_w1, (P1, R1), dtype=jnp.float32)   # std=0.01 init
    adj1 = jax.random.uniform(k_a1, (R1, N1, N1), dtype=jnp.float32)
    o1 = jax.block_until_ready(gtconv(w1, adj1, softmax_flag=True))
    r1 = jnp.einsum("pr,rxy->pxy", jax.nn.softmax(w1, axis=1), adj1)
    assert o1.shape == (P1, N1, N1)
    assert jnp.allclose(o1, r1, atol=1e-5, rtol=1e-5)

    # 2) Multi-step grid with a partial last block and a padded tail.
    P2, R2, N2 = 3, 5, 48
    w2 = 0.01 * jax.random.normal(k_w2, (P2, R2), dtype=jnp.float32)
    adj2 = jax.random.uniform(k_a2, (R2, N2, N2), dtype=jnp.float32)
    o2 = jax.block_until_ready(gtconv(w2, adj2, softmax_flag=True))
    r2 = jnp.einsum("pr,rxy->pxy", jax.nn.softmax(w2, axis=1), adj2)
    assert o2.shape == (P2, N2, N2)
    assert jnp.allclose(o2, r2, atol=1e-5, rtol=1e-5)

    # 3) Copy-free path (N*N a multiple of 1024), 2 grid steps.
    P3, R3, N3 = 4, 4, 64
    w3 = 0.01 * jax.random.normal(k_w3, (P3, R3), dtype=jnp.float32)
    adj3 = jax.random.uniform(k_a3, (R3, N3, N3), dtype=jnp.float32)
    o3 = jax.block_until_ready(gtconv(w3, adj3, softmax_flag=True))
    r3 = jnp.einsum("pr,rxy->pxy", jax.nn.softmax(w3, axis=1), adj3)
    assert jnp.allclose(o3, r3, atol=1e-5, rtol=1e-5)

    # 4) softmax_flag=False path.
    o4 = jax.block_until_ready(gtconv(w1, adj1, softmax_flag=False))
    r4 = jnp.einsum("pr,rxy->pxy", w1, adj1)
    assert jnp.allclose(o4, r4, atol=1e-5, rtol=1e-5)

    print("KERNEL_OK")
</pallas_src>

<mosaic_0001>
module attributes {stable_mosaic.version = 11 : i64} {
  func.func @_gtconv_kernel(%arg0: i32, %arg1: memref<4x4xf32, #tpu.memory_space<smem>>, %arg2: memref<4x8x128xf32, #tpu.memory_space<vmem>>, %arg3: memref<4x8x128xf32, #tpu.memory_space<vmem>>) attributes {dimension_semantics = [#tpu.dimension_semantics<parallel>], iteration_bounds = array<i64: 1>, scalar_prefetch = 0 : i64, scratch_operands = 0 : i64, tpu.core_type = #tpu.core_type<tc>, window_params = [{transform_indices = @transform_0, window_bounds = array<i64: 4, 4>}, {transform_indices = @transform_1, window_bounds = array<i64: 4, 8, 128>}, {transform_indices = @transform_2, window_bounds = array<i64: 4, 8, 128>}]} {
    %c0 = arith.constant 0 : index
    %c0_0 = arith.constant 0 : index
    %0 = memref.load %arg1[%c0, %c0_0] : memref<4x4xf32, #tpu.memory_space<smem>>
    %c0_1 = arith.constant 0 : index
    %c0_2 = arith.constant 0 : index
    %c0_3 = arith.constant 0 : index
    %1 = vector.load %arg2[%c0_1, %c0_2, %c0_3] : memref<4x8x128xf32, #tpu.memory_space<vmem>>, vector<1x8x128xf32>
    %2 = vector.shape_cast %1 : vector<1x8x128xf32> to vector<8x128xf32>
    %3 = vector.broadcast %0 : f32 to vector<8x128xf32>
    %4 = arith.mulf %3, %2 : vector<8x128xf32>
    %c0_4 = arith.constant 0 : index
    %c1 = arith.constant 1 : index
    %5 = memref.load %arg1[%c0_4, %c1] : memref<4x4xf32, #tpu.memory_space<smem>>
    %c1_5 = arith.constant 1 : index
    %c0_6 = arith.constant 0 : index
    %c0_7 = arith.constant 0 : index
    %6 = vector.load %arg2[%c1_5, %c0_6, %c0_7] : memref<4x8x128xf32, #tpu.memory_space<vmem>>, vector<1x8x128xf32>
    %7 = vector.shape_cast %6 : vector<1x8x128xf32> to vector<8x128xf32>
    %8 = vector.broadcast %5 : f32 to vector<8x128xf32>
    %9 = arith.mulf %8, %7 : vector<8x128xf32>
    %10 = arith.addf %4, %9 : vector<8x128xf32>
    %c0_8 = arith.constant 0 : index
    %c2 = arith.constant 2 : index
    %11 = memref.load %arg1[%c0_8, %c2] : memref<4x4xf32, #tpu.memory_space<smem>>
    %c2_9 = arith.constant 2 : index
    %c0_10 = arith.constant 0 : index
    %c0_11 = arith.constant 0 : index
    %12 = vector.load %arg2[%c2_9, %c0_10, %c0_11] : memref<4x8x128xf32, #tpu.memory_space<vmem>>, vector<1x8x128xf32>
    %13 = vector.shape_cast %12 : vector<1x8x128xf32> to vector<8x128xf32>
    %14 = vector.broadcast %11 : f32 to vector<8x128xf32>
    %15 = arith.mulf %14, %13 : vector<8x128xf32>
    %16 = arith.addf %10, %15 : vector<8x128xf32>
    %c0_12 = arith.constant 0 : index
    %c3 = arith.constant 3 : index
    %17 = memref.load %arg1[%c0_12, %c3] : memref<4x4xf32, #tpu.memory_space<smem>>
    %c3_13 = arith.constant 3 : index
    %c0_14 = arith.constant 0 : index
    %c0_15 = arith.constant 0 : index
    %18 = vector.load %arg2[%c3_13, %c0_14, %c0_15] : memref<4x8x128xf32, #tpu.memory_space<vmem>>, vector<1x8x128xf32>
    %19 = vector.shape_cast %18 : vector<1x8x128xf32> to vector<8x128xf32>
    %20 = vector.broadcast %17 : f32 to vector<8x128xf32>
    %21 = arith.mulf %20, %19 : vector<8x128xf32>
    %22 = arith.addf %16, %21 : vector<8x128xf32>
    %c0_16 = arith.constant 0 : index
    %c0_17 = arith.constant 0 : index
    %c0_18 = arith.constant 0 : index
    %23 = vector.load %arg3[%c0_16, %c0_17, %c0_18] : memref<4x8x128xf32, #tpu.memory_space<vmem>>, vector<1x8x128xf32>
    %24 = vector.shape_cast %23 : vector<1x8x128xf32> to vector<8x128xf32>
    %25 = vector.shape_cast %22 : vector<8x128xf32> to vector<1x8x128xf32>
    tpu.vector_store %arg3[%c0_16, %c0_17, %c0_18], %25 {strides = array<i32>} : memref<4x8x128xf32, #tpu.memory_space<vmem>>, vector<1x8x128xf32>,
    %c1_19 = arith.constant 1 : index
    %c0_20 = arith.constant 0 : index
    %26 = memref.load %arg1[%c1_19, %c0_20] : memref<4x4xf32, #tpu.memory_space<smem>>
    %c0_21 = arith.constant 0 : index
    %c0_22 = arith.constant 0 : index
    %c0_23 = arith.constant 0 : index
    %27 = vector.load %arg2[%c0_21, %c0_22, %c0_23] : memref<4x8x128xf32, #tpu.memory_space<vmem>>, vector<1x8x128xf32>
    %28 = vector.shape_cast %27 : vector<1x8x128xf32> to vector<8x128xf32>
    %29 = vector.broadcast %26 : f32 to vector<8x128xf32>
    %30 = arith.mulf %29, %28 : vector<8x128xf32>
    %c1_24 = arith.constant 1 : index
    %c1_25 = arith.constant 1 : index
    %31 = memref.load %arg1[%c1_24, %c1_25] : memref<4x4xf32, #tpu.memory_space<smem>>
    %c1_26 = arith.constant 1 : index
    %c0_27 = arith.constant 0 : index
    %c0_28 = arith.constant 0 : index
    %32 = vector.load %arg2[%c1_26, %c0_27, %c0_28] : memref<4x8x128xf32, #tpu.memory_space<vmem>>, vector<1x8x128xf32>
    %33 = vector.shape_cast %32 : vector<1x8x128xf32> to vector<8x128xf32>
    %34 = vector.broadcast %31 : f32 to vector<8x128xf32>
    %35 = arith.mulf %34, %33 : vector<8x128xf32>
    %36 = arith.addf %30, %35 : vector<8x128xf32>
    %c1_29 = arith.constant 1 : index
    %c2_30 = arith.constant 2 : index
    %37 = memref.load %arg1[%c1_29, %c2_30] : memref<4x4xf32, #tpu.memory_space<smem>>
    %c2_31 = arith.constant 2 : index
    %c0_32 = arith.constant 0 : index
    %c0_33 = arith.constant 0 : index
    %38 = vector.load %arg2[%c2_31, %c0_32, %c0_33] : memref<4x8x128xf32, #tpu.memory_space<vmem>>, vector<1x8x128xf32>
    %39 = vector.shape_cast %38 : vector<1x8x128xf32> to vector<8x128xf32>
    %40 = vector.broadcast %37 : f32 to vector<8x128xf32>
    %41 = arith.mulf %40, %39 : vector<8x128xf32>
    %42 = arith.addf %36, %41 : vector<8x128xf32>
    %c1_34 = arith.constant 1 : index
    %c3_35 = arith.constant 3 : index
    %43 = memref.load %arg1[%c1_34, %c3_35] : memref<4x4xf32, #tpu.memory_space<smem>>
    %c3_36 = arith.constant 3 : index
    %c0_37 = arith.constant 0 : index
    %c0_38 = arith.constant 0 : index
    %44 = vector.load %arg2[%c3_36, %c0_37, %c0_38] : memref<4x8x128xf32, #tpu.memory_space<vmem>>, vector<1x8x128xf32>
    %45 = vector.shape_cast %44 : vector<1x8x128xf32> to vector<8x128xf32>
    %46 = vector.broadcast %43 : f32 to vector<8x128xf32>
    %47 = arith.mulf %46, %45 : vector<8x128xf32>
    %48 = arith.addf %42, %47 : vector<8x128xf32>
    %c1_39 = arith.constant 1 : index
    %c0_40 = arith.constant 0 : index
    %c0_41 = arith.constant 0 : index
    %49 = vector.load %arg3[%c1_39, %c0_40, %c0_41] : memref<4x8x128xf32, #tpu.memory_space<vmem>>, vector<1x8x128xf32>
    %50 = vector.shape_cast %49 : vector<1x8x128xf32> to vector<8x128xf32>
    %51 = vector.shape_cast %48 : vector<8x128xf32> to vector<1x8x128xf32>
    tpu.vector_store %arg3[%c1_39, %c0_40, %c0_41], %51 {strides = array<i32>} : memref<4x8x128xf32, #tpu.memory_space<vmem>>, vector<1x8x128xf32>,
    %c2_42 = arith.constant 2 : index
    %c0_43 = arith.constant 0 : index
    %52 = memref.load %arg1[%c2_42, %c0_43] : memref<4x4xf32, #tpu.memory_space<smem>>
    %c0_44 = arith.constant 0 : index
    %c0_45 = arith.constant 0 : index
    %c0_46 = arith.constant 0 : index
    %53 = vector.load %arg2[%c0_44, %c0_45, %c0_46] : memref<4x8x128xf32, #tpu.memory_space<vmem>>, vector<1x8x128xf32>
    %54 = vector.shape_cast %53 : vector<1x8x128xf32> to vector<8x128xf32>
    %55 = vector.broadcast %52 : f32 to vector<8x128xf32>
    %56 = arith.mulf %55, %54 : vector<8x128xf32>
    %c2_47 = arith.constant 2 : index
    %c1_48 = arith.constant 1 : index
    %57 = memref.load %arg1[%c2_47, %c1_48] : memref<4x4xf32, #tpu.memory_space<smem>>
    %c1_49 = arith.constant 1 : index
    %c0_50 = arith.constant 0 : index
    %c0_51 = arith.constant 0 : index
    %58 = vector.load %arg2[%c1_49, %c0_50, %c0_51] : memref<4x8x128xf32, #tpu.memory_space<vmem>>, vector<1x8x128xf32>
    %59 = vector.shape_cast %58 : vector<1x8x128xf32> to vector<8x128xf32>
    %60 = vector.broadcast %57 : f32 to vector<8x128xf32>
    %61 = arith.mulf %60, %59 : vector<8x128xf32>
    %62 = arith.addf %56, %61 : vector<8x128xf32>
    %c2_52 = arith.constant 2 : index
    %c2_53 = arith.constant 2 : index
    %63 = memref.load %arg1[%c2_52, %c2_53] : memref<4x4xf32, #tpu.memory_space<smem>>
    %c2_54 = arith.constant 2 : index
    %c0_55 = arith.constant 0 : index
    %c0_56 = arith.constant 0 : index
    %64 = vector.load %arg2[%c2_54, %c0_55, %c0_56] : memref<4x8x128xf32, #tpu.memory_space<vmem>>, vector<1x8x128xf32>
    %65 = vector.shape_cast %64 : vector<1x8x128xf32> to vector<8x128xf32>
    %66 = vector.broadcast %63 : f32 to vector<8x128xf32>
    %67 = arith.mulf %66, %65 : vector<8x128xf32>
    %68 = arith.addf %62, %67 : vector<8x128xf32>
    %c2_57 = arith.constant 2 : index
    %c3_58 = arith.constant 3 : index
    %69 = memref.load %arg1[%c2_57, %c3_58] : memref<4x4xf32, #tpu.memory_space<smem>>
    %c3_59 = arith.constant 3 : index
    %c0_60 = arith.constant 0 : index
    %c0_61 = arith.constant 0 : index
    %70 = vector.load %arg2[%c3_59, %c0_60, %c0_61] : memref<4x8x128xf32, #tpu.memory_space<vmem>>, vector<1x8x128xf32>
    %71 = vector.shape_cast %70 : vector<1x8x128xf32> to vector<8x128xf32>
    %72 = vector.broadcast %69 : f32 to vector<8x128xf32>
    %73 = arith.mulf %72, %71 : vector<8x128xf32>
    %74 = arith.addf %68, %73 : vector<8x128xf32>
    %c2_62 = arith.constant 2 : index
    %c0_63 = arith.constant 0 : index
    %c0_64 = arith.constant 0 : index
    %75 = vector.load %arg3[%c2_62, %c0_63, %c0_64] : memref<4x8x128xf32, #tpu.memory_space<vmem>>, vector<1x8x128xf32>
    %76 = vector.shape_cast %75 : vector<1x8x128xf32> to vector<8x128xf32>
    %77 = vector.shape_cast %74 : vector<8x128xf32> to vector<1x8x128xf32>
    tpu.vector_store %arg3[%c2_62, %c0_63, %c0_64], %77 {strides = array<i32>} : memref<4x8x128xf32, #tpu.memory_space<vmem>>, vector<1x8x128xf32>,
    %c3_65 = arith.constant 3 : index
    %c0_66 = arith.constant 0 : index
    %78 = memref.load %arg1[%c3_65, %c0_66] : memref<4x4xf32, #tpu.memory_space<smem>>
    %c0_67 = arith.constant 0 : index
    %c0_68 = arith.constant 0 : index
    %c0_69 = arith.constant 0 : index
    %79 = vector.load %arg2[%c0_67, %c0_68, %c0_69] : memref<4x8x128xf32, #tpu.memory_space<vmem>>, vector<1x8x128xf32>
    %80 = vector.shape_cast %79 : vector<1x8x128xf32> to vector<8x128xf32>
    %81 = vector.broadcast %78 : f32 to vector<8x128xf32>
    %82 = arith.mulf %81, %80 : vector<8x128xf32>
    %c3_70 = arith.constant 3 : index
    %c1_71 = arith.constant 1 : index
    %83 = memref.load %arg1[%c3_70, %c1_71] : memref<4x4xf32, #tpu.memory_space<smem>>
    %c1_72 = arith.constant 1 : index
    %c0_73 = arith.constant 0 : index
    %c0_74 = arith.constant 0 : index
    %84 = vector.load %arg2[%c1_72, %c0_73, %c0_74] : memref<4x8x128xf32, #tpu.memory_space<vmem>>, vector<1x8x128xf32>
    %85 = vector.shape_cast %84 : vector<1x8x128xf32> to vector<8x128xf32>
    %86 = vector.broadcast %83 : f32 to vector<8x128xf32>
    %87 = arith.mulf %86, %85 : vector<8x128xf32>
    %88 = arith.addf %82, %87 : vector<8x128xf32>
    %c3_75 = arith.constant 3 : index
    %c2_76 = arith.constant 2 : index
    %89 = memref.load %arg1[%c3_75, %c2_76] : memref<4x4xf32, #tpu.memory_space<smem>>
    %c2_77 = arith.constant 2 : index
    %c0_78 = arith.constant 0 : index
    %c0_79 = arith.constant 0 : index
    %90 = vector.load %arg2[%c2_77, %c0_78, %c0_79] : memref<4x8x128xf32, #tpu.memory_space<vmem>>, vector<1x8x128xf32>
    %91 = vector.shape_cast %90 : vector<1x8x128xf32> to vector<8x128xf32>
    %92 = vector.broadcast %89 : f32 to vector<8x128xf32>
    %93 = arith.mulf %92, %91 : vector<8x128xf32>
    %94 = arith.addf %88, %93 : vector<8x128xf32>
    %c3_80 = arith.constant 3 : index
    %c3_81 = arith.constant 3 : index
    %95 = memref.load %arg1[%c3_80, %c3_81] : memref<4x4xf32, #tpu.memory_space<smem>>
    %c3_82 = arith.constant 3 : index
    %c0_83 = arith.constant 0 : index
    %c0_84 = arith.constant 0 : index
    %96 = vector.load %arg2[%c3_82, %c0_83, %c0_84] : memref<4x8x128xf32, #tpu.memory_space<vmem>>, vector<1x8x128xf32>
    %97 = vector.shape_cast %96 : vector<1x8x128xf32> to vector<8x128xf32>
    %98 = vector.broadcast %95 : f32 to vector<8x128xf32>
    %99 = arith.mulf %98, %97 : vector<8x128xf32>
    %100 = arith.addf %94, %99 : vector<8x128xf32>
    %c3_85 = arith.constant 3 : index
    %c0_86 = arith.constant 0 : index
    %c0_87 = arith.constant 0 : index
    %101 = vector.load %arg3[%c3_85, %c0_86, %c0_87] : memref<4x8x128xf32, #tpu.memory_space<vmem>>, vector<1x8x128xf32>
    %102 = vector.shape_cast %101 : vector<1x8x128xf32> to vector<8x128xf32>
    %103 = vector.shape_cast %100 : vector<8x128xf32> to vector<1x8x128xf32>
    tpu.vector_store %arg3[%c3_85, %c0_86, %c0_87], %103 {strides = array<i32>} : memref<4x8x128xf32, #tpu.memory_space<vmem>>, vector<1x8x128xf32>,
    return
  }
  func.func @transform_0(%arg0: i32) -> (i32, i32) {
    %c0_i32 = arith.constant 0 : i32
    %c0_i32_0 = arith.constant 0 : i32
    %c0_i32_1 = arith.constant 0 : i32
    return %c0_i32, %c0_i32_0 : i32, i32
  }
  func.func @transform_1(%arg0: i32) -> (i32, i32, i32) {
    %c0_i32 = arith.constant 0 : i32
    %c0_i32_0 = arith.constant 0 : i32
    %c0_i32_1 = arith.constant 0 : i32
    return %c0_i32, %arg0, %c0_i32_0 : i32, i32, i32
  }
  func.func @transform_2(%arg0: i32) -> (i32, i32, i32) {
    %c0_i32 = arith.constant 0 : i32
    %c0_i32_0 = arith.constant 0 : i32
    %c0_i32_1 = arith.constant 0 : i32
    return %c0_i32, %arg0, %c0_i32_0 : i32, i32, i32
  }
}

</mosaic_0001>

<llo_original>
// kernel: tpu_custom_call.1
$region0: #{tpu_custom_call.1}
  #allocation0 [shape = 'u32[]', space=smem, size = 0x4, offset = 0x4, fixed_abs, tag = 'smem constant byte address 0x4 - core index']
  #allocation1 [shape = 'u32[72,128]{1,0:T(1,128)}', space=vmem, size = 0x9000, scoped, tag = 'internal scratch']
  %s0 = inlined_call_operand.hbm [shape: f32[4,4], index: 0, kind: input, shape index: {}]
  %s1 = inlined_call_operand.hbm [shape: f32[4,8,128], index: 1, kind: input, shape index: {}]
  %s2 = inlined_call_operand.hbm [shape: f32[4,8,128], index: 2, kind: output, shape index: {}]
  %s3 = sld [smem:[#allocation0]]
  $region26: #{tpu_custom_call.1} parent=0
    _
  %s5 = ssub.s32 1, %s3
  %s6 = scalar_select 0, %s5, %s3
  $region1: #{tpu_custom_call.1} parent=0
    #allocation2 [shape = 'u8[2048]{0}', space=smem, size = 0x800, scoped, tag = 'input window, operand 0, single buffered']
    #allocation3 [shape = 's32[1]{0}', space=sflag, size = 0x4, scoped, tag = 'scoped memory for tpu_custom_call.1']
    #allocation4 [shape = 's32[1]{0}', space=sflag, size = 0x4, scoped, tag = 'scoped memory for tpu_custom_call.1']
    #allocation5 [shape = 's32[1]{0}', space=sflag, size = 0x4, scoped, tag = 'scoped memory for tpu_custom_call.1']
    #allocation6 [shape = 'u8[16384]{0}', space=vmem, size = 0x4000, scoped, tag = 'input window, operand 1, single buffered']
    #allocation7 [shape = 'u8[16384]{0}', space=vmem, size = 0x4000, scoped, tag = 'output window, operand 0, single buffered']
    %7 = vsyncpa [#allocation5], 0
    %8 = vsyncpa [#allocation3], 0
    %9 = vsyncpa [#allocation4], 0
    // Predicated region
    $region2: #{tpu_custom_call.1} parent=1 // pred_check
      _
    $region3: #{tpu_custom_call.1} parent=1 // pred_check_branch
      %11 = sbr.rel (0) target = $region5
    $region4: #{tpu_custom_call.1} parent=1 // pred_region
      %13 = vsyncadd [#allocation5], 0
      %s15 = sshll.u32 %s0, 4
      %s16 = int_to_ptr.hbm [resolvable:$true] %s15
      %18 = dma.hbm_to_smem %s16, 64, [#allocation2], [#allocation5]
    $region5: #{tpu_custom_call.1} parent=1 // pred_fallthru
      _
    // Predicated region
    $region6: #{tpu_custom_call.1} parent=1 // pred_check
      _
    $region7: #{tpu_custom_call.1} parent=1 // pred_check_branch
      %20 = sbr.rel (0) target = $region9
    $region8: #{tpu_custom_call.1} parent=1 // pred_region
      %22 = vsyncadd [#allocation3], 0
      %s23 = sshll.u32 %s1, 4
      %s24 = int_to_ptr.hbm [resolvable:$true] %s23
      %s25 = sshll.u32 [#allocation6], 4
      %s26 = int_to_ptr.vmem [resolvable:$true] %s25
      %31 = dma.hbm_to_vmem [thread:$0]  %s24, 512, %s26, [#allocation3], 128, 128, 8
    $region9: #{tpu_custom_call.1} parent=1 // pred_fallthru
      _
    // Predicated region
    $region10: #{tpu_custom_call.1} parent=1 // pred_check
      _
    $region11: #{tpu_custom_call.1} parent=1 // pred_check_branch
      %33 = sbr.rel (0) target = $region13
    $region12: #{tpu_custom_call.1} parent=1 // pred_region
      %35 = dma.done [#allocation5], 64
    $region13: #{tpu_custom_call.1} parent=1 // pred_fallthru
      _
    // Predicated region
    $region14: #{tpu_custom_call.1} parent=1 // pred_check
      _
    $region15: #{tpu_custom_call.1} parent=1 // pred_check_branch
      %37 = sbr.rel (0) target = $region17
    $region16: #{tpu_custom_call.1} parent=1 // pred_region
      %39 = dma.done [#allocation3], 512
    $region17: #{tpu_custom_call.1} parent=1 // pred_fallthru
      _
    %40 = sfence
    %s41 = sld [smem:[#allocation2]]
    %v42 = vld [vmem:[#allocation6] sm:$0xff]
    %v43 = vstv %s41
    %v44 = vmul.f32 %v43, %v42
    %s45 = sld [smem:[#allocation2 + $0x1]]
    %s46 = scalar_lea.vmem [#allocation6], 8
    %v47 = vld [vmem:[%s46] sm:$0xff]
    %v48 = vstv %s45
    %v49 = vmul.f32 %v48, %v47
    %v50 = vadd.f32 %v44, %v49
    %s51 = sld [smem:[#allocation2 + $0x2]]
    %s52 = scalar_lea.vmem [#allocation6], 16
    %v53 = vld [vmem:[%s52] sm:$0xff]
    %v54 = vstv %s51
    %v55 = vmul.f32 %v54, %v53
    %v56 = vadd.f32 %v50, %v55
    %s57 = sld [smem:[#allocation2 + $0x3]]
    %s58 = scalar_lea.vmem [#allocation6], 24
    %v59 = vld [vmem:[%s58] sm:$0xff]
    %v60 = vstv %s57
    %v61 = vmul.f32 %v60, %v59
    %v62 = vadd.f32 %v56, %v61
    %63 = vst [vmem:[#allocation7] sm:$0xff] %v62
    %s64 = sld [smem:[#allocation2 + $0x80]]
    %v65 = vld [vmem:[#allocation6] sm:$0xff]
    %v66 = vstv %s64
    %v67 = vmul.f32 %v66, %v65
    %s68 = sld [smem:[#allocation2 + $0x81]]
    %v69 = vld [vmem:[%s46] sm:$0xff]
    %v70 = vstv %s68
    %v71 = vmul.f32 %v70, %v69
    %v72 = vadd.f32 %v67, %v71
    %s73 = sld [smem:[#allocation2 + $0x82]]
    %v74 = vld [vmem:[%s52] sm:$0xff]
    %v75 = vstv %s73
    %v76 = vmul.f32 %v75, %v74
    %v77 = vadd.f32 %v72, %v76
    %s78 = sld [smem:[#allocation2 + $0x83]]
    %v79 = vld [vmem:[%s58] sm:$0xff]
    %v80 = vstv %s78
    %v81 = vmul.f32 %v80, %v79
    %v82 = vadd.f32 %v77, %v81
    %s83 = scalar_lea.vmem [#allocation7], 8
    %84 = vst [vmem:[%s83] sm:$0xff] %v82
    %s85 = sld [smem:[#allocation2 + $0x100]]
    %v86 = vld [vmem:[#allocation6] sm:$0xff]
    %v87 = vstv %s85
    %v88 = vmul.f32 %v87, %v86
    %s89 = sld [smem:[#allocation2 + $0x101]]
    %v90 = vld [vmem:[%s46] sm:$0xff]
    %v91 = vstv %s89
    %v92 = vmul.f32 %v91, %v90
    %v93 = vadd.f32 %v88, %v92
    %s94 = sld [smem:[#allocation2 + $0x102]]
    %v95 = vld [vmem:[%s52] sm:$0xff]
    %v96 = vstv %s94
    %v97 = vmul.f32 %v96, %v95
    %v98 = vadd.f32 %v93, %v97
    %s99 = sld [smem:[#allocation2 + $0x103]]
    %v100 = vld [vmem:[%s58] sm:$0xff]
    %v101 = vstv %s99
    %v102 = vmul.f32 %v101, %v100
    %v103 = vadd.f32 %v98, %v102
    %s104 = scalar_lea.vmem [#allocation7], 16
    %105 = vst [vmem:[%s104] sm:$0xff] %v103
    %s106 = sld [smem:[#allocation2 + $0x180]]
    %v107 = vld [vmem:[#allocation6] sm:$0xff]
    %v108 = vstv %s106
    %v109 = vmul.f32 %v108, %v107
    %s110 = sld [smem:[#allocation2 + $0x181]]
    %v111 = vld [vmem:[%s46] sm:$0xff]
    %v112 = vstv %s110
    %v113 = vmul.f32 %v112, %v111
    %v114 = vadd.f32 %v109, %v113
    %s115 = sld [smem:[#allocation2 + $0x182]]
    %v116 = vld [vmem:[%s52] sm:$0xff]
    %v117 = vstv %s115
    %v118 = vmul.f32 %v117, %v116
    %v119 = vadd.f32 %v114, %v118
    %s120 = sld [smem:[#allocation2 + $0x183]]
    %v121 = vld [vmem:[%s58] sm:$0xff]
    %v122 = vstv %s120
    %v123 = vmul.f32 %v122, %v121
    %v124 = vadd.f32 %v119, %v123
    %s125 = scalar_lea.vmem [#allocation7], 24
    %126 = vst [vmem:[%s125] sm:$0xff] %v124
    // Predicated region
    $region18: #{tpu_custom_call.1} parent=1 // pred_check
      _
    $region19: #{tpu_custom_call.1} parent=1 // pred_check_branch
      %128 = sbr.rel (0) target = $region21
    $region20: #{tpu_custom_call.1} parent=1 // pred_region
      %130 = vsyncadd [#allocation4], 0
      %s131 = sshll.u32 [#allocation7], 4
      %s132 = int_to_ptr.vmem [resolvable:$true] %s131
      %s133 = sshll.u32 %s2, 4
      %s134 = int_to_ptr.hbm [resolvable:$true] %s133
      %139 = dma.vmem_to_hbm [thread:$0]  %s132, 512, %s134, [#allocation4], 128, 128, 8
    $region21: #{tpu_custom_call.1} parent=1 // pred_fallthru
      _
    // Predicated region
    $region22: #{tpu_custom_call.1} parent=1 // pred_check
      _
    $region23: #{tpu_custom_call.1} parent=1 // pred_check_branch
      %141 = sbr.rel (0) target = $region25
    $region24: #{tpu_custom_call.1} parent=1 // pred_region
      %143 = dma.done [#allocation4], 512
    $region25: #{tpu_custom_call.1} parent=1 // pred_fallthru
      _
    %144 = vsyncpa [#allocation3], 1
    %145 = vsyncpa [#allocation4], 1
    %146 = vsyncpa [#allocation5], 1

</llo_original>
